<compile_context>
chip_gen: v6e
topology: v6e:2x2x1
jax: 0.10.0
libtpu: 0.0.40
codegen_flags: <defaults>
</compile_context>

<pallas_src>
import functools

import jax
import jax.numpy as jnp
from jax.experimental import pallas as pl
from jax.experimental.pallas import tpu as pltpu

_EPS = 1e-5          # PyTorch GroupNorm default eps
_LANE = 128
_MAX_THW = 128 * _LANE   # caps the unrolled lane-group adds at 128 per tile


def _coseg_attention_kernel(x_ref, w1_ref, b1_ref, g1_ref, be1_ref,
                            w2_ref, b2_ref, g2_ref, be2_ref,
                            o_ref, acc_ref, *, inv_hw, hw, ragged):
    s = pl.program_id(1)
    thw = x_ref.shape[-1]
    lane_acc = acc_ref.ndim == 3          # (TB, C, 128) lane-wise accumulator?

    @pl.when(s == 0)
    def _zero():
        acc_ref[...] = jnp.zeros_like(acc_ref)

    # --- Hot loop: HBM-bound partial spatial sum -----------------------------
    tile = x_ref[...].astype(jnp.float32)               # (TB, C, THW)
    if ragged:
        # Last spatial tile extends past H*W: zero the out-of-bounds lanes.
        # (For non-last tiles hw - s*thw >= thw, so the mask is all-true.)
        lane = jax.lax.broadcasted_iota(jnp.int32, tile.shape, 2)
        tile = jnp.where(lane < (hw - s * thw), tile, 0.0)

    if lane_acc:
        # Lane-wise partial sums: lane-aligned slice adds only (pure VPU,
        # no cross-lane reduce / relayout in the steady state).
        psum = tile[:, :, 0:_LANE]
        for g in range(1, thw // _LANE):
            psum = psum + tile[:, :, g * _LANE:(g + 1) * _LANE]
        acc_ref[...] += psum
    else:
        acc_ref[...] += jnp.sum(tile, axis=-1)           # (TB, C)

    # --- Epilogue: pooled -> MLP, once per batch tile ------------------------
    @pl.when(s == pl.num_programs(1) - 1)
    def _finalize():
        if lane_acc:
            # Single cross-lane reduce (XLU) + relayout, once per batch tile.
            pooled = jnp.sum(acc_ref[...], axis=-1) * inv_hw     # (TB, C)
        else:
            pooled = acc_ref[...] * inv_hw                       # (TB, C)

        # NOTE: if B % TB != 0, padded rows of the last batch tile carry
        # undefined data here. This is safe ONLY because every epilogue op is
        # row-wise (per-sample norm / matmul rows); the out-of-bounds rows of
        # o_ref are never written back. Do not add cross-row reductions here.

        # LinearBlock 1: fc -> GroupNorm(1, 2C) -> tanh
        h = jnp.dot(pooled, w1_ref[...].astype(jnp.float32),
                    preferred_element_type=jnp.float32)
        h = h + b1_ref[...].astype(jnp.float32)
        mu = jnp.mean(h, axis=-1, keepdims=True)
        var = jnp.mean(jnp.square(h - mu), axis=-1, keepdims=True)  # biased (PyTorch GN)
        h = (h - mu) * jax.lax.rsqrt(var + _EPS)
        h = jnp.tanh(h * g1_ref[...].astype(jnp.float32)
                     + be1_ref[...].astype(jnp.float32))

        # LinearBlock 2: fc -> GroupNorm(1, C) -> sigmoid
        y = jnp.dot(h, w2_ref[...].astype(jnp.float32),
                    preferred_element_type=jnp.float32)
        y = y + b2_ref[...].astype(jnp.float32)
        mu2 = jnp.mean(y, axis=-1, keepdims=True)
        var2 = jnp.mean(jnp.square(y - mu2), axis=-1, keepdims=True)
        y = (y - mu2) * jax.lax.rsqrt(var2 + _EPS)
        y = jax.nn.sigmoid(y * g2_ref[...].astype(jnp.float32)
                           + be2_ref[...].astype(jnp.float32))

        o_ref[...] = y.astype(o_ref.dtype)


def _round_up(v, m):
    return (v + m - 1) // m * m


def _choose_tiling(B, C, HW, itemsize, budget_bytes):
    """Pick (TB, THW).

    TB must be a multiple of 8 or equal B (output-block sublane rule).
    THW is a multiple of 128 (or the full spatial extent)."""
    if B <= 8:
        tb_unit = B
        tb_cap = B
    else:
        tb_unit = 8
        # Keep >= 2 batch tiles so both v7x TensorCores get work; v5e/v6e
        # (single TC) only see one extra cheap grid step.
        tb_cap = min(_round_up(B, 8), max(8, _round_up(-(-B // 2), 8)))

    if HW <= _MAX_THW and tb_unit * C * HW * itemsize <= budget_bytes:
        thw = HW                                    # whole spatial extent per block
    else:
        max_thw = budget_bytes // (tb_unit * C * itemsize)
        max_thw = max(_LANE, min(_MAX_THW, (max_thw // _LANE) * _LANE))
        thw = None
        t = max_thw
        while t >= _LANE:                           # prefer a tile dividing HW exactly
            if HW % t == 0:
                thw = t
                break
            t -= _LANE
        if thw is None:
            thw = max_thw                           # ragged last tile (masked in-kernel)
        if thw >= HW:                               # degenerate tiny-HW case
            thw = HW

    # Grow TB toward tb_cap while one x block stays within the budget
    # (fewer ~0.35 us grid steps, bigger contiguous DMAs, taller epilogue matmul).
    if B <= 8:
        tb = B
    else:
        rows = budget_bytes // (C * thw * itemsize)
        tb = int(min(tb_cap, max(8, (rows // 8) * 8)))
    return tb, thw


def coseg_attention(x, params, *, spatial_budget_bytes=None):
    """x: (B, C, H, W), float32 or bfloat16 (feed bf16 from the producer to
    halve the dominant HBM read; accumulation stays f32 in-kernel).
    Returns (B, C, 1, 1) sigmoid gate in x.dtype."""
    B, C, H, W = x.shape
    HW = H * W
    x_flat = x.reshape(B, C, HW)                    # free metadata reshape

    # Generation-aware budgets.
    try:
        vmem_cap = int(pltpu.get_tpu_info().vmem_capacity_bytes)
    except Exception:
        vmem_cap = 64 * 1024 * 1024                 # conservative (v7x per-TC)
    if spatial_budget_bytes is None:
        # ~16 MiB on v5e/v6e (128 MiB VMEM), ~8 MiB on v7x (64 MiB VMEM).
        spatial_budget_bytes = max(4 * 1024 * 1024, vmem_cap // 8)

    itemsize = x.dtype.itemsize
    TB, THW = _choose_tiling(B, C, HW, itemsize, spatial_budget_bytes)
    ragged = (HW % THW) != 0
    lane_acc = (THW % _LANE) == 0

    grid = (pl.cdiv(B, TB), pl.cdiv(HW, THW))       # reduction axis LAST

    w1, b1, g1, be1 = params["w1"], params["b1"], params["g1"], params["be1"]
    w2, b2, g2, be2 = params["w2"], params["b2"], params["g2"], params["be2"]
    param_list = (w1, b1, g1, be1, w2, b2, g2, be2)
    param_bytes = sum(int(p.size) * p.dtype.itemsize for p in param_list)

    # Params never change across the grid, so a second pipeline buffer is pure
    # VMEM waste; only request single-buffering when the footprint matters
    # (large C) so the common small case keeps the default pipelining path.
    single_buffer_params = param_bytes > (4 * 1024 * 1024)

    def const_spec(arr):
        nd = arr.ndim
        idx = lambda b, s, _n=nd: (0,) * _n
        if single_buffer_params:
            return pl.BlockSpec(arr.shape, idx, pipeline_mode=pl.Buffered(1))
        return pl.BlockSpec(arr.shape, idx)

    # Buffer-accurate VMEM budget, capped per-generation (no fixed 48 MiB clamp).
    x_block_bytes = TB * C * THW * itemsize
    out_block_bytes = TB * C * x.dtype.itemsize
    acc_bytes = TB * C * (_LANE if lane_acc else 1) * 4
    param_bufs = 1 if single_buffer_params else 2
    need = (2 * x_block_bytes + param_bufs * param_bytes
            + 2 * out_block_bytes + acc_bytes)
    vmem_limit = int(min(vmem_cap - vmem_cap // 8,
                         max(32 * 1024 * 1024, need + (4 << 20))))

    kernel = functools.partial(_coseg_attention_kernel,
                               inv_hw=1.0 / float(HW), hw=HW, ragged=ragged)

    acc_scratch = (pltpu.VMEM((TB, C, _LANE), jnp.float32) if lane_acc
                   else pltpu.VMEM((TB, C), jnp.float32))

    out = pl.pallas_call(
        kernel,
        out_shape=jax.ShapeDtypeStruct((B, C), x.dtype),
        grid_spec=pltpu.PrefetchScalarGridSpec(
            num_scalar_prefetch=0,
            grid=grid,
            in_specs=[
                pl.BlockSpec((TB, C, THW), lambda b, s: (b, 0, s)),
                const_spec(w1), const_spec(b1), const_spec(g1), const_spec(be1),
                const_spec(w2), const_spec(b2), const_spec(g2), const_spec(be2),
            ],
            out_specs=pl.BlockSpec((TB, C), lambda b, s: (b, 0)),
            scratch_shapes=[acc_scratch],
        ),
        compiler_params=pltpu.CompilerParams(
            dimension_semantics=("parallel", "arbitrary"),
            vmem_limit_bytes=vmem_limit,
        ),
    )(x_flat, w1, b1, g1, be1, w2, b2, g2, be2)

    return out.reshape(B, C, 1, 1)


def coseg_attention_ref(x, params):
    """Pure-JAX reference (mirrors the PyTorch module with norm='ln')."""
    B, C, H, W = x.shape
    pooled = jnp.mean(x.reshape(B, C, H * W).astype(jnp.float32), axis=-1)

    def block(v, w, b, g, be, act):
        h = v @ w.astype(jnp.float32) + b.astype(jnp.float32)
        mu = jnp.mean(h, axis=-1, keepdims=True)
        var = jnp.mean(jnp.square(h - mu), axis=-1, keepdims=True)
        h = (h - mu) * jax.lax.rsqrt(var + _EPS)
        return act(h * g.astype(jnp.float32) + be.astype(jnp.float32))

    h = block(pooled, params["w1"], params["b1"], params["g1"], params["be1"], jnp.tanh)
    y = block(h, params["w2"], params["b2"], params["g2"], params["be2"], jax.nn.sigmoid)
    return y.reshape(B, C, 1, 1).astype(x.dtype)


def init_params(key, curr_dim):
    """Deterministic synthetic params mirroring the module's shapes.
    Linear: PyTorch-style U(-1/sqrt(fan_in), 1/sqrt(fan_in)); weights stored
    (in_dim, out_dim). GroupNorm affine: weight=1, bias=0 (PyTorch defaults)."""
    hid = curr_dim * 2
    k1, k2, k3, k4 = jax.random.split(key, 4)
    lim1 = 1.0 / (curr_dim ** 0.5)
    lim2 = 1.0 / (hid ** 0.5)
    return dict(
        w1=jax.random.uniform(k1, (curr_dim, hid), jnp.float32, -lim1, lim1),
        b1=jax.random.uniform(k2, (1, hid), jnp.float32, -lim1, lim1),
        g1=jnp.ones((1, hid), jnp.float32),
        be1=jnp.zeros((1, hid), jnp.float32),
        w2=jax.random.uniform(k3, (hid, curr_dim), jnp.float32, -lim2, lim2),
        b2=jax.random.uniform(k4, (1, curr_dim), jnp.float32, -lim2, lim2),
        g2=jnp.ones((1, curr_dim), jnp.float32),
        be2=jnp.zeros((1, curr_dim), jnp.float32),
    )


if __name__ == "__main__":
    key = jax.random.PRNGKey(0)
    k_x, k_p, k_x2, k_p2, k_x3, k_p3 = jax.random.split(key, 6)

    # 1) Default path: whole spatial extent in one block, lane-group accumulate.
    B, C, H, W = 2, 4, 16, 16
    x = jax.random.normal(k_x, (B, C, H, W), dtype=jnp.float32)
    params = init_params(k_p, C)
    ref = coseg_attention_ref(x, params)
    out = jax.block_until_ready(coseg_attention(x, params))
    assert out.shape == (B, C, 1, 1), out.shape
    assert bool(jnp.all(jnp.isfinite(out)))
    assert bool(jnp.all((out >= 0.0) & (out <= 1.0)))      # sigmoid output range
    assert bool(jnp.allclose(out, ref, rtol=1e-5, atol=1e-5))

    # 2) Forced spatial tiling (grid (1, 2)): accumulator zero/accumulate/finalize.
    out2 = jax.block_until_ready(
        coseg_attention(x, params, spatial_budget_bytes=4 * 1024))
    assert bool(jnp.allclose(out2, ref, rtol=1e-5, atol=1e-5))

    # 3) Ragged spatial tiles (HW=324, THW=128): in-kernel lane masking, no jnp.pad.
    x3 = jax.random.normal(k_x2, (2, 8, 18, 18), dtype=jnp.float32)
    p3 = init_params(k_p2, 8)
    ref3 = coseg_attention_ref(x3, p3)
    out3 = jax.block_until_ready(
        coseg_attention(x3, p3, spatial_budget_bytes=8 * 1024))
    assert bool(jnp.allclose(out3, ref3, rtol=1e-5, atol=1e-5))

    # 4) B > 8: two batch tiles (TB=8, last tile row-padded) + cross-lane fallback (HW=64).
    x4 = jax.random.normal(k_x3, (10, 8, 8, 8), dtype=jnp.float32)
    p4 = init_params(k_p3, 8)
    ref4 = coseg_attention_ref(x4, p4)
    out4 = jax.block_until_ready(coseg_attention(x4, p4))
    assert bool(jnp.allclose(out4, ref4, rtol=1e-5, atol=1e-5))

    # 5) bf16 activations (halved HBM read); in-kernel accumulation stays f32.
    x_bf16 = x.astype(jnp.bfloat16)
    ref5 = coseg_attention_ref(x_bf16, params)
    out5 = jax.block_until_ready(coseg_attention(x_bf16, params))
    assert out5.dtype == jnp.bfloat16
    assert bool(jnp.allclose(out5.astype(jnp.float32),
                             ref5.astype(jnp.float32), atol=2e-2))

    print("KERNEL_OK")
</pallas_src>

<mosaic_0001>
module attributes {stable_mosaic.version = 11 : i64} {
  func.func @_coseg_attention_kernel(%arg0: i32, %arg1: i32, %arg2: memref<2x4x256xf32, #tpu.memory_space<vmem>>, %arg3: memref<4x8xf32, #tpu.memory_space<vmem>>, %arg4: memref<1x8xf32, #tpu.memory_space<vmem>>, %arg5: memref<1x8xf32, #tpu.memory_space<vmem>>, %arg6: memref<1x8xf32, #tpu.memory_space<vmem>>, %arg7: memref<8x4xf32, #tpu.memory_space<vmem>>, %arg8: memref<1x4xf32, #tpu.memory_space<vmem>>, %arg9: memref<1x4xf32, #tpu.memory_space<vmem>>, %arg10: memref<1x4xf32, #tpu.memory_space<vmem>>, %arg11: memref<2x4xf32, #tpu.memory_space<vmem>>, %arg12: memref<2x4x128xf32, #tpu.memory_space<vmem>>) attributes {dimension_semantics = [#tpu.dimension_semantics<parallel>, #tpu.dimension_semantics<arbitrary>], iteration_bounds = array<i64: 1, 1>, scalar_prefetch = 0 : i64, scratch_operands = 1 : i64, tpu.core_type = #tpu.core_type<tc>, window_params = [{transform_indices = @transform_0, window_bounds = array<i64: 2, 4, 256>}, {pipeline_mode = #tpu.pipeline_mode<synchronous>, transform_indices = @transform_1, window_bounds = array<i64: 4, 8>}, {pipeline_mode = #tpu.pipeline_mode<synchronous>, transform_indices = @transform_2, window_bounds = array<i64: 1, 8>}, {pipeline_mode = #tpu.pipeline_mode<synchronous>, transform_indices = @transform_3, window_bounds = array<i64: 1, 8>}, {pipeline_mode = #tpu.pipeline_mode<synchronous>, transform_indices = @transform_4, window_bounds = array<i64: 1, 8>}, {pipeline_mode = #tpu.pipeline_mode<synchronous>, transform_indices = @transform_5, window_bounds = array<i64: 8, 4>}, {pipeline_mode = #tpu.pipeline_mode<synchronous>, transform_indices = @transform_6, window_bounds = array<i64: 1, 4>}, {pipeline_mode = #tpu.pipeline_mode<synchronous>, transform_indices = @transform_7, window_bounds = array<i64: 1, 4>}, {pipeline_mode = #tpu.pipeline_mode<synchronous>, transform_indices = @transform_8, window_bounds = array<i64: 1, 4>}, {transform_indices = @transform_9, window_bounds = array<i64: 2, 4>}]} {
    %c0_i32 = arith.constant 0 : i32
    %0 = arith.cmpi eq, %arg1, %c0_i32 : i32
    %1 = arith.extui %0 : i1 to i32
    %c0_i32_0 = arith.constant 0 : i32
    %2 = arith.cmpi ne, %1, %c0_i32_0 : i32
    scf.if %2 {
      %cst = arith.constant 0.000000e+00 : f32
      %13 = vector.broadcast %cst : f32 to vector<2x4x128xf32>
      %c0_11 = arith.constant 0 : index
      %c0_12 = arith.constant 0 : index
      %c0_13 = arith.constant 0 : index
      %14 = vector.load %arg12[%c0_11, %c0_12, %c0_13] : memref<2x4x128xf32, #tpu.memory_space<vmem>>, vector<2x4x128xf32>
      tpu.vector_store %arg12[%c0_11, %c0_12, %c0_13], %13 {strides = array<i32>} : memref<2x4x128xf32, #tpu.memory_space<vmem>>, vector<2x4x128xf32>,
    } else {
    }
    %c0 = arith.constant 0 : index
    %c0_1 = arith.constant 0 : index
    %c0_2 = arith.constant 0 : index
    %3 = vector.load %arg2[%c0, %c0_1, %c0_2] : memref<2x4x256xf32, #tpu.memory_space<vmem>>, vector<2x4x256xf32>
    %4 = vector.extract_strided_slice %3 {offsets = [0, 0, 0], sizes = [2, 4, 128], strides = [1, 1, 1]} : vector<2x4x256xf32> to vector<2x4x128xf32>
    %5 = vector.extract_strided_slice %3 {offsets = [0, 0, 128], sizes = [2, 4, 128], strides = [1, 1, 1]} : vector<2x4x256xf32> to vector<2x4x128xf32>
    %6 = arith.addf %4, %5 : vector<2x4x128xf32>
    %c0_3 = arith.constant 0 : index
    %c0_4 = arith.constant 0 : index
    %c0_5 = arith.constant 0 : index
    %7 = vector.load %arg12[%c0_3, %c0_4, %c0_5] : memref<2x4x128xf32, #tpu.memory_space<vmem>>, vector<2x4x128xf32>
    %8 = arith.addf %7, %6 : vector<2x4x128xf32>
    %c0_6 = arith.constant 0 : index
    %c0_7 = arith.constant 0 : index
    %c0_8 = arith.constant 0 : index
    %9 = vector.load %arg12[%c0_6, %c0_7, %c0_8] : memref<2x4x128xf32, #tpu.memory_space<vmem>>, vector<2x4x128xf32>
    tpu.vector_store %arg12[%c0_6, %c0_7, %c0_8], %8 {strides = array<i32>} : memref<2x4x128xf32, #tpu.memory_space<vmem>>, vector<2x4x128xf32>,
    %c0_i32_9 = arith.constant 0 : i32
    %10 = arith.cmpi eq, %arg1, %c0_i32_9 : i32
    %11 = arith.extui %10 : i1 to i32
    %c0_i32_10 = arith.constant 0 : i32
    %12 = arith.cmpi ne, %11, %c0_i32_10 : i32
    scf.if %12 {
      %c0_11 = arith.constant 0 : index
      %c0_12 = arith.constant 0 : index
      %c0_13 = arith.constant 0 : index
      %13 = vector.load %arg12[%c0_11, %c0_12, %c0_13] : memref<2x4x128xf32, #tpu.memory_space<vmem>>, vector<2x4x128xf32>
      %cst = arith.constant dense<0.000000e+00> : vector<2x4xf32>
      %14 = vector.multi_reduction <add>, %13, %cst [2] : vector<2x4x128xf32> to vector<2x4xf32>
      %cst_14 = arith.constant 3.906250e-03 : f32
      %15 = vector.broadcast %cst_14 : f32 to vector<2x4xf32>
      %16 = arith.mulf %14, %15 : vector<2x4xf32>
      %c0_15 = arith.constant 0 : index
      %c0_16 = arith.constant 0 : index
      %17 = vector.load %arg3[%c0_15, %c0_16] : memref<4x8xf32, #tpu.memory_space<vmem>>, vector<4x8xf32>
      %cst_17 = arith.constant dense<0.000000e+00> : vector<2x8xf32>
      %18 = tpu.matmul %16, %17, %cst_17 {dimension_numbers = #tpu.dot_dimension_numbers<[1], [0], [0], [1], [0, 0, 1, 1], [], []>} : vector<2x4xf32>, vector<4x8xf32>, vector<2x8xf32> -> vector<2x8xf32>
      %c0_18 = arith.constant 0 : index
      %c0_19 = arith.constant 0 : index
      %19 = vector.load %arg4[%c0_18, %c0_19] : memref<1x8xf32, #tpu.memory_space<vmem>>, vector<1x8xf32>
      %20 = vector.broadcast %19 : vector<1x8xf32> to vector<2x8xf32>
      %21 = arith.addf %18, %20 : vector<2x8xf32>
      %cst_20 = arith.constant dense<0.000000e+00> : vector<2xf32>
      %22 = vector.multi_reduction <add>, %21, %cst_20 [1] : vector<2x8xf32> to vector<2xf32>
      %23 = vector.shape_cast %22 : vector<2xf32> to vector<2x1xf32>
      %cst_21 = arith.constant 8.000000e+00 : f32
      %24 = vector.broadcast %cst_21 : f32 to vector<2x1xf32>
      %25 = arith.divf %23, %24 : vector<2x1xf32>
      %26 = vector.broadcast %25 : vector<2x1xf32> to vector<2x8xf32>
      %27 = arith.subf %21, %26 : vector<2x8xf32>
      %28 = arith.mulf %27, %27 : vector<2x8xf32>
      %cst_22 = arith.constant dense<0.000000e+00> : vector<2xf32>
      %29 = vector.multi_reduction <add>, %28, %cst_22 [1] : vector<2x8xf32> to vector<2xf32>
      %30 = vector.shape_cast %29 : vector<2xf32> to vector<2x1xf32>
      %cst_23 = arith.constant 8.000000e+00 : f32
      %31 = vector.broadcast %cst_23 : f32 to vector<2x1xf32>
      %32 = arith.divf %30, %31 : vector<2x1xf32>
      %33 = vector.broadcast %25 : vector<2x1xf32> to vector<2x8xf32>
      %34 = arith.subf %21, %33 : vector<2x8xf32>
      %cst_24 = arith.constant 9.99999974E-6 : f32
      %35 = vector.broadcast %cst_24 : f32 to vector<2x1xf32>
      %36 = arith.addf %32, %35 : vector<2x1xf32>
      %37 = math.rsqrt %36 : vector<2x1xf32>
      %38 = vector.broadcast %37 : vector<2x1xf32> to vector<2x8xf32>
      %39 = arith.mulf %34, %38 : vector<2x8xf32>
      %c0_25 = arith.constant 0 : index
      %c0_26 = arith.constant 0 : index
      %40 = vector.load %arg5[%c0_25, %c0_26] : memref<1x8xf32, #tpu.memory_space<vmem>>, vector<1x8xf32>
      %41 = vector.broadcast %40 : vector<1x8xf32> to vector<2x8xf32>
      %42 = arith.mulf %39, %41 : vector<2x8xf32>
      %c0_27 = arith.constant 0 : index
      %c0_28 = arith.constant 0 : index
      %43 = vector.load %arg6[%c0_27, %c0_28] : memref<1x8xf32, #tpu.memory_space<vmem>>, vector<1x8xf32>
      %44 = vector.broadcast %43 : vector<1x8xf32> to vector<2x8xf32>
      %45 = arith.addf %42, %44 : vector<2x8xf32>
      %46 = math.tanh %45 : vector<2x8xf32>
      %c0_29 = arith.constant 0 : index
      %c0_30 = arith.constant 0 : index
      %47 = vector.load %arg7[%c0_29, %c0_30] : memref<8x4xf32, #tpu.memory_space<vmem>>, vector<8x4xf32>
      %cst_31 = arith.constant dense<0.000000e+00> : vector<2x4xf32>
      %48 = tpu.matmul %46, %47, %cst_31 {dimension_numbers = #tpu.dot_dimension_numbers<[1], [0], [0], [1], [0, 0, 1, 1], [], []>} : vector<2x8xf32>, vector<8x4xf32>, vector<2x4xf32> -> vector<2x4xf32>
      %c0_32 = arith.constant 0 : index
      %c0_33 = arith.constant 0 : index
      %49 = vector.load %arg8[%c0_32, %c0_33] : memref<1x4xf32, #tpu.memory_space<vmem>>, vector<1x4xf32>
      %50 = vector.broadcast %49 : vector<1x4xf32> to vector<2x4xf32>
      %51 = arith.addf %48, %50 : vector<2x4xf32>
      %cst_34 = arith.constant dense<0.000000e+00> : vector<2xf32>
      %52 = vector.multi_reduction <add>, %51, %cst_34 [1] : vector<2x4xf32> to vector<2xf32>
      %53 = vector.shape_cast %52 : vector<2xf32> to vector<2x1xf32>
      %cst_35 = arith.constant 4.000000e+00 : f32
      %54 = vector.broadcast %cst_35 : f32 to vector<2x1xf32>
      %55 = arith.divf %53, %54 : vector<2x1xf32>
      %56 = vector.broadcast %55 : vector<2x1xf32> to vector<2x4xf32>
      %57 = arith.subf %51, %56 : vector<2x4xf32>
      %58 = arith.mulf %57, %57 : vector<2x4xf32>
      %cst_36 = arith.constant dense<0.000000e+00> : vector<2xf32>
      %59 = vector.multi_reduction <add>, %58, %cst_36 [1] : vector<2x4xf32> to vector<2xf32>
      %60 = vector.shape_cast %59 : vector<2xf32> to vector<2x1xf32>
      %cst_37 = arith.constant 4.000000e+00 : f32
      %61 = vector.broadcast %cst_37 : f32 to vector<2x1xf32>
      %62 = arith.divf %60, %61 : vector<2x1xf32>
      %63 = vector.broadcast %55 : vector<2x1xf32> to vector<2x4xf32>
      %64 = arith.subf %51, %63 : vector<2x4xf32>
      %cst_38 = arith.constant 9.99999974E-6 : f32
      %65 = vector.broadcast %cst_38 : f32 to vector<2x1xf32>
      %66 = arith.addf %62, %65 : vector<2x1xf32>
      %67 = math.rsqrt %66 : vector<2x1xf32>
      %68 = vector.broadcast %67 : vector<2x1xf32> to vector<2x4xf32>
      %69 = arith.mulf %64, %68 : vector<2x4xf32>
      %c0_39 = arith.constant 0 : index
      %c0_40 = arith.constant 0 : index
      %70 = vector.load %arg9[%c0_39, %c0_40] : memref<1x4xf32, #tpu.memory_space<vmem>>, vector<1x4xf32>
      %71 = vector.broadcast %70 : vector<1x4xf32> to vector<2x4xf32>
      %72 = arith.mulf %69, %71 : vector<2x4xf32>
      %c0_41 = arith.constant 0 : index
      %c0_42 = arith.constant 0 : index
      %73 = vector.load %arg10[%c0_41, %c0_42] : memref<1x4xf32, #tpu.memory_space<vmem>>, vector<1x4xf32>
      %74 = vector.broadcast %73 : vector<1x4xf32> to vector<2x4xf32>
      %75 = arith.addf %72, %74 : vector<2x4xf32>
      %76 = arith.negf %75 : vector<2x4xf32>
      %77 = math.exp %76 : vector<2x4xf32>
      %cst_43 = arith.constant 1.000000e+00 : f32
      %78 = vector.broadcast %cst_43 : f32 to vector<2x4xf32>
      %79 = arith.addf %78, %77 : vector<2x4xf32>
      %80 = arith.divf %78, %79 : vector<2x4xf32>
      %c0_44 = arith.constant 0 : index
      %c0_45 = arith.constant 0 : index
      %81 = vector.load %arg11[%c0_44, %c0_45] : memref<2x4xf32, #tpu.memory_space<vmem>>, vector<2x4xf32>
      tpu.vector_store %arg11[%c0_44, %c0_45], %80 {strides = array<i32>} : memref<2x4xf32, #tpu.memory_space<vmem>>, vector<2x4xf32>,
    } else {
    }
    return
  }
  func.func @transform_0(%arg0: i32, %arg1: i32) -> (i32, i32, i32) {
    %c0_i32 = arith.constant 0 : i32
    %c0_i32_0 = arith.constant 0 : i32
    return %arg0, %c0_i32, %arg1 : i32, i32, i32
  }
  func.func @transform_1(%arg0: i32, %arg1: i32) -> (i32, i32) {
    %c0_i32 = arith.constant 0 : i32
    %c0_i32_0 = arith.constant 0 : i32
    %c0_i32_1 = arith.constant 0 : i32
    return %c0_i32, %c0_i32_0 : i32, i32
  }
  func.func @transform_2(%arg0: i32, %arg1: i32) -> (i32, i32) {
    %c0_i32 = arith.constant 0 : i32
    %c0_i32_0 = arith.constant 0 : i32
    %c0_i32_1 = arith.constant 0 : i32
    return %c0_i32, %c0_i32_0 : i32, i32
  }
  func.func @transform_3(%arg0: i32, %arg1: i32) -> (i32, i32) {
    %c0_i32 = arith.constant 0 : i32
    %c0_i32_0 = arith.constant 0 : i32
    %c0_i32_1 = arith.constant 0 : i32
    return %c0_i32, %c0_i32_0 : i32, i32
  }
  func.func @transform_4(%arg0: i32, %arg1: i32) -> (i32, i32) {
    %c0_i32 = arith.constant 0 : i32
    %c0_i32_0 = arith.constant 0 : i32
    %c0_i32_1 = arith.constant 0 : i32
    return %c0_i32, %c0_i32_0 : i32, i32
  }
  func.func @transform_5(%arg0: i32, %arg1: i32) -> (i32, i32) {
    %c0_i32 = arith.constant 0 : i32
    %c0_i32_0 = arith.constant 0 : i32
    %c0_i32_1 = arith.constant 0 : i32
    return %c0_i32, %c0_i32_0 : i32, i32
  }
  func.func @transform_6(%arg0: i32, %arg1: i32) -> (i32, i32) {
    %c0_i32 = arith.constant 0 : i32
    %c0_i32_0 = arith.constant 0 : i32
    %c0_i32_1 = arith.constant 0 : i32
    return %c0_i32, %c0_i32_0 : i32, i32
  }
  func.func @transform_7(%arg0: i32, %arg1: i32) -> (i32, i32) {
    %c0_i32 = arith.constant 0 : i32
    %c0_i32_0 = arith.constant 0 : i32
    %c0_i32_1 = arith.constant 0 : i32
    return %c0_i32, %c0_i32_0 : i32, i32
  }
  func.func @transform_8(%arg0: i32, %arg1: i32) -> (i32, i32) {
    %c0_i32 = arith.constant 0 : i32
    %c0_i32_0 = arith.constant 0 : i32
    %c0_i32_1 = arith.constant 0 : i32
    return %c0_i32, %c0_i32_0 : i32, i32
  }
  func.func @transform_9(%arg0: i32, %arg1: i32) -> (i32, i32) {
    %c0_i32 = arith.constant 0 : i32
    %c0_i32_0 = arith.constant 0 : i32
    return %arg0, %c0_i32 : i32, i32
  }
}

</mosaic_0001>

<llo_original>
// kernel: tpu_custom_call.1
$region0: #{tpu_custom_call.1}
  #allocation0 [shape = 'u32[]', space=smem, size = 0x4, offset = 0x4, fixed_abs, tag = 'smem constant byte address 0x4 - core index']
  #allocation1 [shape = 'u32[144,128]{1,0:T(1,128)}', space=vmem, size = 0x12000, scoped, tag = 'internal scratch']
  #allocation2 [shape = 'f32[2,4,128]{2,1,0:T(4,128)}', space=vmem, size = 0x1000, scoped, tag = 'scratch operand']
  %s0 = inlined_call_operand.hbm [shape: f32[2,4,256], index: 0, kind: input, shape index: {}]
  %s1 = inlined_call_operand.vmem [shape: f32[4,8], index: 1, kind: input, shape index: {}]
  %s2 = inlined_call_operand.vmem [shape: f32[1,8], index: 2, kind: input, shape index: {}]
  %s3 = inlined_call_operand.vmem [shape: f32[1,8], index: 3, kind: input, shape index: {}]
  %s4 = inlined_call_operand.vmem [shape: f32[1,8], index: 4, kind: input, shape index: {}]
  %s5 = inlined_call_operand.vmem [shape: f32[8,4], index: 5, kind: input, shape index: {}]
  %s6 = inlined_call_operand.vmem [shape: f32[1,4], index: 6, kind: input, shape index: {}]
  %s7 = inlined_call_operand.vmem [shape: f32[1,4], index: 7, kind: input, shape index: {}]
  %s8 = inlined_call_operand.vmem [shape: f32[1,4], index: 8, kind: input, shape index: {}]
  %s9 = inlined_call_operand.hbm [shape: f32[2,4], index: 9, kind: output, shape index: {}]
  %s10 = sld [smem:[#allocation0]]
  $region58: #{tpu_custom_call.1} parent=0
    _
  %s12 = ssub.s32 1, %s10
  %s13 = scalar_select 0, %s12, %s10
  $region1: #{tpu_custom_call.1} parent=0
    #allocation3 [shape = 'u8[8192]{0}', space=vmem, size = 0x2000, scoped, tag = 'input window, operand 0, single buffered']
    #allocation4 [shape = 's32[1]{0}', space=sflag, size = 0x4, scoped, tag = 'scoped memory for tpu_custom_call.1']
    #allocation5 [shape = 's32[1]{0}', space=sflag, size = 0x4, scoped, tag = 'scoped memory for tpu_custom_call.1']
    #allocation6 [shape = 'u8[1024]{0}', space=vmem, size = 0x400, scoped, tag = 'output window, operand 0, single buffered']
    %14 = vsyncpa [#allocation4], 0
    %15 = vsyncpa [#allocation5], 0
    // Predicated region
    $region2: #{tpu_custom_call.1} parent=1 // pred_check
      _
    $region3: #{tpu_custom_call.1} parent=1 // pred_check_branch
      %17 = sbr.rel (0) target = $region5
    $region4: #{tpu_custom_call.1} parent=1 // pred_region
      %s19 = ssub.s32 256, 256
      %20 = vsyncadd [#allocation4], %s19
      %s21 = sshll.u32 [#allocation3], 4
      %s22 = int_to_ptr.vmem [resolvable:$true] %s21
      %27 = dma.hbm_to_vmem [thread:$0]  %s0, 256, %s22, [#allocation4], 128, 128, 8
    $region5: #{tpu_custom_call.1} parent=1 // pred_fallthru
      _
    // Predicated region
    $region6: #{tpu_custom_call.1} parent=1 // pred_check
      _
    $region7: #{tpu_custom_call.1} parent=1 // pred_check_branch
      %29 = sbr.rel (0) target = $region9
    $region8: #{tpu_custom_call.1} parent=1 // pred_region
      _
    $region9: #{tpu_custom_call.1} parent=1 // pred_fallthru
      _
    // Predicated region
    $region10: #{tpu_custom_call.1} parent=1 // pred_check
      _
    $region11: #{tpu_custom_call.1} parent=1 // pred_check_branch
      %31 = sbr.rel (0) target = $region13
    $region12: #{tpu_custom_call.1} parent=1 // pred_region
      _
    $region13: #{tpu_custom_call.1} parent=1 // pred_fallthru
      _
    // Predicated region
    $region14: #{tpu_custom_call.1} parent=1 // pred_check
      _
    $region15: #{tpu_custom_call.1} parent=1 // pred_check_branch
      %33 = sbr.rel (0) target = $region17
    $region16: #{tpu_custom_call.1} parent=1 // pred_region
      _
    $region17: #{tpu_custom_call.1} parent=1 // pred_fallthru
      _
    // Predicated region
    $region18: #{tpu_custom_call.1} parent=1 // pred_check
      _
    $region19: #{tpu_custom_call.1} parent=1 // pred_check_branch
      %35 = sbr.rel (0) target = $region21
    $region20: #{tpu_custom_call.1} parent=1 // pred_region
      _
    $region21: #{tpu_custom_call.1} parent=1 // pred_fallthru
      _
    // Predicated region
    $region22: #{tpu_custom_call.1} parent=1 // pred_check
      _
    $region23: #{tpu_custom_call.1} parent=1 // pred_check_branch
      %37 = sbr.rel (0) target = $region25
    $region24: #{tpu_custom_call.1} parent=1 // pred_region
      _
    $region25: #{tpu_custom_call.1} parent=1 // pred_fallthru
      _
    // Predicated region
    $region26: #{tpu_custom_call.1} parent=1 // pred_check
      _
    $region27: #{tpu_custom_call.1} parent=1 // pred_check_branch
      %39 = sbr.rel (0) target = $region29
    $region28: #{tpu_custom_call.1} parent=1 // pred_region
      _
    $region29: #{tpu_custom_call.1} parent=1 // pred_fallthru
      _
    // Predicated region
    $region30: #{tpu_custom_call.1} parent=1 // pred_check
      _
    $region31: #{tpu_custom_call.1} parent=1 // pred_check_branch
      %41 = sbr.rel (0) target = $region33
    $region32: #{tpu_custom_call.1} parent=1 // pred_region
      _
    $region33: #{tpu_custom_call.1} parent=1 // pred_fallthru
      _
    // Predicated region
    $region34: #{tpu_custom_call.1} parent=1 // pred_check
      _
    $region35: #{tpu_custom_call.1} parent=1 // pred_check_branch
      %43 = sbr.rel (0) target = $region37
    $region36: #{tpu_custom_call.1} parent=1 // pred_region
      _
    $region37: #{tpu_custom_call.1} parent=1 // pred_fallthru
      _
    // Predicated region
    $region38: #{tpu_custom_call.1} parent=1 // pred_check
      _
    $region39: #{tpu_custom_call.1} parent=1 // pred_check_branch
      %45 = sbr.rel (0) target = $region41
    $region40: #{tpu_custom_call.1} parent=1 // pred_region
      %46 = dma.done [#allocation4], 256
    $region41: #{tpu_custom_call.1} parent=1 // pred_fallthru
      _
    %p47 = scmp.eq.s32.totalorder 0, 0
    // Predicated region
    $region42: #{tpu_custom_call.1} parent=1 // pred_check
      %p48 = pneg %p47
    $region43: #{tpu_custom_call.1} parent=1 // pred_check_branch
      %50 = sbr.rel (%p48) target = $region45
    $region44: #{tpu_custom_call.1} parent=1 // pred_region
      %51 = vst [vmem:[#allocation2] sm:$0xf] 0.0
      %52 = vst [vmem:[#allocation2 + $0x4] sm:$0xf] 0.0
    $region45: #{tpu_custom_call.1} parent=1 // pred_fallthru
      _
    %v53 = vld [vmem:[#allocation3] sm:$0xff]
    %v54 = vld [vmem:[#allocation3 + $0x8] sm:$0xff]
    %v57 = vrot.slane %v53, 4
    %v58 = vrot.slane %v54, 4
    %v61 = vadd.f32 %v53, %v57
    %v62 = vadd.f32 %v54, %v58
    %v63 = vld [vmem:[#allocation2] sm:$0xf]
    %v64 = vld [vmem:[#allocation2 + $0x4] sm:$0xf]
    %v65 = vadd.f32 %v63, %v61
    %v66 = vadd.f32 %v64, %v62
    %67 = vst [vmem:[#allocation2] sm:$0xf] %v65
    %68 = vst [vmem:[#allocation2 + $0x4] sm:$0xf] %v66
    // Predicated region
    $region46: #{tpu_custom_call.1} parent=1 // pred_check
      %p69 = pneg %p47
    $region47: #{tpu_custom_call.1} parent=1 // pred_check_branch
      %71 = sbr.rel (%p69) target = $region49
    $region48: #{tpu_custom_call.1} parent=1 // pred_region
      %v72 = vld [vmem:[#allocation2] sm:$0xf]
      %v73 = vld [vmem:[#allocation2 + $0x4] sm:$0xf]
      %vm74 = vcmask 1043456
      %v75 = vsel %vm74, %v72, 0.0
      %76 = vadd.xlane.f32.xlu0 %v75
      %v77 = vpop.xlane.xlu0 %76
      %v78 = vsel %vm74, %v73, 0.0
      %79 = vadd.xlane.f32.xlu0 %v78
      %v80 = vpop.xlane.xlu0 %79
      %v81 = vmul.f32 %v77, 0.00390625
      %v82 = vmul.f32 %v80, 0.00390625
      %v83 = vld [vmem:[%s1] sm:$0xf]
      %v84 = vld [vmem:[%s2] sm:$0x1]
      %v86 = vlaneseq
      %v87 = vshrl.u32 %v86, 7
      %v88 = vsub.s32 0, %v87
      %v89 = vrot.slane %v84, %v88
      %v93 = vlaneseq
      %v94 = vand.u32 %v93, 127
      %v95 = vlaneseq
      %v96 = vshrl.u32 %v95, 7
      %v97 = vsub.s32 %v94, %v96
      %v98 = vrot.slane %v81, %v97
      %v99 = vlaneseq
      %v100 = vshrl.u32 %v99, 7
      %v101 = vsub.s32 %v94, %v100
      %v102 = vrot.slane %v82, %v101
      %vm103 = vcmask 1041409
      %v104 = vsel %vm103, %v102, %v98
      %vm105 = vcmask 31744
      %v106 = vsel %vm105, %v104, 0
      %v109 = vsel %vm74, %v83, 0
      %111 = vmatprep.subr.mxu0 0.0
      %112 = vmatpush1.msra.mxu0 0.0
      %113 = vmatprep.subr.mxu0 0.0
      %114 = vmatpush1.msra.mxu0 0.0
      %115 = vmatprep.subr.mxu0 0.0
      %116 = vmatpush1.msra.mxu0 0.0
      %117 = vmatprep.subr.mxu0 0.0
      %118 = vmatpush1.msra.mxu0 0.0
      %119 = vmatprep.subr.mxu0 0.0
      %120 = vmatpush1.msra.mxu0 0.0
      %121 = vmatprep.subr.mxu0 0.0
      %122 = vmatpush1.msra.mxu0 0.0
      %123 = vmatprep.subr.mxu0 0.0
      %124 = vmatpush1.msra.mxu0 0.0
      %125 = vmatprep.subr.mxu0 0.0
      %126 = vmatpush1.msra.mxu0 0.0
      %127 = vmatprep.subr.mxu0 0.0
      %128 = vmatpush1.msra.mxu0 0.0
      %129 = vmatprep.subr.mxu0 0.0
      %130 = vmatpush1.msra.mxu0 0.0
      %131 = vmatprep.subr.mxu0 0.0
      %132 = vmatpush1.msra.mxu0 0.0
      %133 = vmatprep.subr.mxu0 0.0
      %134 = vmatpush1.msra.mxu0 0.0
      %135 = vmatprep.subr.mxu0 0.0
      %136 = vmatpush1.msra.mxu0 0.0
      %137 = vmatprep.subr.mxu0 0.0
      %138 = vmatpush1.msra.mxu0 0.0
      %139 = vmatprep.subr.mxu0 0.0
      %140 = vmatpush1.msra.mxu0 0.0
      %141 = vmatprep.subr.mxu0 0.0
      %142 = vmatpush1.msra.mxu0 %v109
      %143 = vmatprep.subr.mxu0 0.0
      %144 = vmatpush2.msra.mxu0 0.0
      %145 = vmatprep.subr.mxu0 0.0
      %146 = vmatpush2.msra.mxu0 0.0
      %147 = vmatprep.subr.mxu0 0.0
      %148 = vmatpush2.msra.mxu0 0.0
      %149 = vmatprep.subr.mxu0 0.0
      %150 = vmatpush2.msra.mxu0 0.0
      %151 = vmatprep.subr.mxu0 0.0
      %152 = vmatpush2.msra.mxu0 0.0
      %153 = vmatprep.subr.mxu0 0.0
      %154 = vmatpush2.msra.mxu0 0.0
      %155 = vmatprep.subr.mxu0 0.0
      %156 = vmatpush2.msra.mxu0 0.0
      %157 = vmatprep.subr.mxu0 0.0
      %158 = vmatpush2.msra.mxu0 0.0
      %159 = vmatprep.subr.mxu0 0.0
      %160 = vmatpush2.msra.mxu0 0.0
      %161 = vmatprep.subr.mxu0 0.0
      %162 = vmatpush2.msra.mxu0 0.0
      %163 = vmatprep.subr.mxu0 0.0
      %164 = vmatpush2.msra.mxu0 0.0
      %165 = vmatprep.subr.mxu0 0.0
      %166 = vmatpush2.msra.mxu0 0.0
      %167 = vmatprep.subr.mxu0 0.0
      %168 = vmatpush2.msra.mxu0 0.0
      %169 = vmatprep.subr.mxu0 0.0
      %170 = vmatpush2.msra.mxu0 0.0
      %171 = vmatprep.subr.mxu0 0.0
      %172 = vmatpush2.msra.mxu0 0.0
      %173 = vmatprep.subr.mxu0 0.0
      %174 = vmatpush2.msra.mxu0 0.0
      %175 = vmatprep.mubr.f32.mxu0 0.0
      %176 = vmatmul.mubr.f32.gmra.mxu0 %v106
      %v177 = vpop.f32.mrf.mxu0
      %v178 = vadd.f32 %v89, %v177
      %v179 = vpop.f32.mrf.mxu0
      %180 = vdwg.mxu0
      %vm181 = vcmask 58368
      %v182 = vsel %vm181, %v178, 0.0
      %183 = vadd.xlane.f32.xlu0 %v182
      %v184 = vpop.xlane.xlu0 %183
      %v185 = vrcp.pop 8.0
      %v186 = vmul.f32 %v184, %v185
      %v187 = vsub.f32 %v178, %v186
      %v188 = vmul.f32 %v187, %v187
      %v189 = vsel %vm181, %v188, 0.0
      %190 = vadd.xlane.f32.xlu0 %v189
      %v191 = vpop.xlane.xlu0 %190
      %v192 = vmul.f32 %v191, %v185
      %v193 = vadd.f32 %v192, 1e-05
      %v194 = vrsqrt.pop %v193
      %v195 = vmul.f32 %v187, %v194
      %v196 = vld [vmem:[%s3] sm:$0x1]
      %v198 = vlaneseq
      %v199 = vshrl.u32 %v198, 7
      %v200 = vsub.s32 0, %v199
      %v201 = vrot.slane %v196, %v200
      %v203 = vmul.f32 %v195, %v201
      %v204 = vld [vmem:[%s4] sm:$0x1]
      %v206 = vlaneseq
      %v207 = vshrl.u32 %v206, 7
      %v208 = vsub.s32 0, %v207
      %v209 = vrot.slane %v204, %v208
      %v211 = vadd.f32 %v203, %v209
      %v212 = vtanh.pop %v211
      %v213 = vld [vmem:[%s5] sm:$0xff]
      %v214 = vld [vmem:[%s6] sm:$0x1]
      %v216 = vlaneseq
      %v217 = vshrl.u32 %v216, 7
      %v218 = vsub.s32 0, %v217
      %v219 = vrot.slane %v214, %v218
      %vm221 = vcmask 64512
      %v223 = vsel %vm221, %v212, 0
      %225 = vmatprep.subr.mxu0 0.0
      %226 = vmatpush1.msra.mxu0 0.0
      %227 = vmatprep.subr.mxu0 0.0
      %228 = vmatpush1.msra.mxu0 0.0
      %229 = vmatprep.subr.mxu0 0.0
      %230 = vmatpush1.msra.mxu0 0.0
      %231 = vmatprep.subr.mxu0 0.0
      %232 = vmatpush1.msra.mxu0 0.0
      %233 = vmatprep.subr.mxu0 0.0
      %234 = vmatpush1.msra.mxu0 0.0
      %235 = vmatprep.subr.mxu0 0.0
      %236 = vmatpush1.msra.mxu0 0.0
      %237 = vmatprep.subr.mxu0 0.0
      %238 = vmatpush1.msra.mxu0 0.0
      %239 = vmatprep.subr.mxu0 0.0
      %240 = vmatpush1.msra.mxu0 0.0
      %241 = vmatprep.subr.mxu0 0.0
      %242 = vmatpush1.msra.mxu0 0.0
      %243 = vmatprep.subr.mxu0 0.0
      %244 = vmatpush1.msra.mxu0 0.0
      %245 = vmatprep.subr.mxu0 0.0
      %246 = vmatpush1.msra.mxu0 0.0
      %247 = vmatprep.subr.mxu0 0.0
      %248 = vmatpush1.msra.mxu0 0.0
      %249 = vmatprep.subr.mxu0 0.0
      %250 = vmatpush1.msra.mxu0 0.0
      %251 = vmatprep.subr.mxu0 0.0
      %252 = vmatpush1.msra.mxu0 0.0
      %253 = vmatprep.subr.mxu0 0.0
      %254 = vmatpush1.msra.mxu0 0.0
      %255 = vmatprep.subr.mxu0 0.0
      %256 = vmatpush1.msra.mxu0 %v213
      %257 = vmatprep.subr.mxu0 0.0
      %258 = vmatpush2.msra.mxu0 0.0
      %259 = vmatprep.subr.mxu0 0.0
      %260 = vmatpush2.msra.mxu0 0.0
      %261 = vmatprep.subr.mxu0 0.0
      %262 = vmatpush2.msra.mxu0 0.0
      %263 = vmatprep.subr.mxu0 0.0
      %264 = vmatpush2.msra.mxu0 0.0
      %265 = vmatprep.subr.mxu0 0.0
      %266 = vmatpush2.msra.mxu0 0.0
      %267 = vmatprep.subr.mxu0 0.0
      %268 = vmatpush2.msra.mxu0 0.0
      %269 = vmatprep.subr.mxu0 0.0
      %270 = vmatpush2.msra.mxu0 0.0
      %271 = vmatprep.subr.mxu0 0.0
      %272 = vmatpush2.msra.mxu0 0.0
      %273 = vmatprep.subr.mxu0 0.0
      %274 = vmatpush2.msra.mxu0 0.0
      %275 = vmatprep.subr.mxu0 0.0
      %276 = vmatpush2.msra.mxu0 0.0
      %277 = vmatprep.subr.mxu0 0.0
      %278 = vmatpush2.msra.mxu0 0.0
      %279 = vmatprep.subr.mxu0 0.0
      %280 = vmatpush2.msra.mxu0 0.0
      %281 = vmatprep.subr.mxu0 0.0
      %282 = vmatpush2.msra.mxu0 0.0
      %283 = vmatprep.subr.mxu0 0.0
      %284 = vmatpush2.msra.mxu0 0.0
      %285 = vmatprep.subr.mxu0 0.0
      %286 = vmatpush2.msra.mxu0 0.0
      %287 = vmatprep.subr.mxu0 0.0
      %288 = vmatpush2.msra.mxu0 0.0
      %289 = vmatprep.mubr.f32.mxu0 0.0
      %290 = vmatmul.mubr.f32.gmra.mxu0 %v223
      %v291 = vpop.f32.mrf.mxu0
      %v292 = vadd.f32 %v219, %v291
      %v293 = vpop.f32.mrf.mxu0
      %294 = vdwg.mxu0
      %vm295 = vcmask 25600
      %v296 = vsel %vm295, %v292, 0.0
      %297 = vadd.xlane.f32.xlu0 %v296
      %v298 = vpop.xlane.xlu0 %297
      %v299 = vrcp.pop 4.0
      %v300 = vmul.f32 %v298, %v299
      %v301 = vsub.f32 %v292, %v300
      %v302 = vmul.f32 %v301, %v301
      %v303 = vsel %vm295, %v302, 0.0
      %304 = vadd.xlane.f32.xlu0 %v303
      %v305 = vpop.xlane.xlu0 %304
      %v306 = vmul.f32 %v305, %v299
      %v307 = vadd.f32 %v306, 1e-05
      %v308 = vrsqrt.pop %v307
      %v309 = vmul.f32 %v301, %v308
      %v310 = vld [vmem:[%s7] sm:$0x1]
      %v312 = vlaneseq
      %v313 = vshrl.u32 %v312, 7
      %v314 = vsub.s32 0, %v313
      %v315 = vrot.slane %v310, %v314
      %v317 = vmul.f32 %v309, %v315
      %v318 = vld [vmem:[%s8] sm:$0x1]
      %v320 = vlaneseq
      %v321 = vshrl.u32 %v320, 7
      %v322 = vsub.s32 0, %v321
      %v323 = vrot.slane %v318, %v322
      %v325 = vadd.f32 %v317, %v323
      %v326 = vxor.u32 %v325, 2147483648
      %v327 = vmul.f32 %v326, 1.442695
      %v328 = vpow.pop %v327
      %v329 = vadd.f32 %v328, 1.0
      %v330 = vrcp.pop %v329
      %v331 = vmul.f32 1.0, %v330
      %332 = vst.msk [vmem:[#allocation6] sm:$0x3] %vm295, %v331
    $region49: #{tpu_custom_call.1} parent=1 // pred_fallthru
      _
    // Predicated region
    $region50: #{tpu_custom_call.1} parent=1 // pred_check
      _
    $region51: #{tpu_custom_call.1} parent=1 // pred_check_branch
      %334 = sbr.rel (0) target = $region53
    $region52: #{tpu_custom_call.1} parent=1 // pred_region
      %s336 = ssub.s32 32, 32
      %337 = vsyncadd [#allocation5], %s336
      %s339 = sshll.u32 [#allocation6], 4
      %s340 = int_to_ptr.vmem [resolvable:$true] %s339
      %342 = dma.vmem_to_hbm [thread:$0]  %s340, 32, %s9, [#allocation5]
    $region53: #{tpu_custom_call.1} parent=1 // pred_fallthru
      _
    // Predicated region
    $region54: #{tpu_custom_call.1} parent=1 // pred_check
      _
    $region55: #{tpu_custom_call.1} parent=1 // pred_check_branch
      %344 = sbr.rel (0) target = $region57
    $region56: #{tpu_custom_call.1} parent=1 // pred_region
      %345 = dma.done [#allocation5], 32
    $region57: #{tpu_custom_call.1} parent=1 // pred_fallthru
      _
    %346 = vsyncpa [#allocation4], 1
    %347 = vsyncpa [#allocation5], 1

</llo_original>
